<compile_context>
chip_gen: v7x
topology: tpu7x:2x2x1
jax: 0.10.0
libtpu: 0.0.40
codegen_flags: <defaults>
</compile_context>

<pallas_src>
import jax
import jax.numpy as jnp
from jax.experimental import pallas as pl
from jax.experimental.pallas import tpu as pltpu

LN_EPS = 1e-5
BN_EPS = 1e-5

_VMEM_BUDGET = 40 * 1024 * 1024      # conservative across v5e/v6e/v7x
_VMEM_LIMIT_CAP = 48 * 1024 * 1024   # below v7x's 64 MiB physical VMEM
_MAX_TILE_ROWS = 2048


def _round_up(x, m):
    return ((x + m - 1) // m) * m


def _padded_block_bytes(rows, cols, itemsize):
    """Physical VMEM footprint of a (rows, cols) block: lanes->128, sublanes->8/16."""
    sub = 8 * (4 // itemsize)            # 8 sublanes for f32, 16 for bf16
    return _round_up(max(rows, 1), sub) * _round_up(max(cols, 1), 128) * itemsize


def _vmem_bytes(n_tile, c, k_pad):
    """Estimate of VMEM needed by one grid step (padded physical sizes)."""
    b = 2 * _padded_block_bytes(n_tile, c, 2)        # x tile, bf16, double-buffered
    b += 2 * _padded_block_bytes(n_tile, k_pad, 2)   # out tile, bf16, double-buffered
    b += 2 * _padded_block_bytes(c, c, 2)            # w_attn, w1 (bf16, single-buffered)
    b += _padded_block_bytes(c, k_pad, 2)            # w2 (bf16, single-buffered)
    b += _padded_block_bytes(1, c, 4)                # b1 (f32)
    b += _padded_block_bytes(1, k_pad, 4)            # b2 (f32)
    # f32 intermediates live in the body (h/attn/mx/y + final out before cast)
    b += 4 * _padded_block_bytes(n_tile, c, 4)
    b += _padded_block_bytes(n_tile, k_pad, 4)
    return b


def _pick_n_tile(n, c, k_pad):
    """Largest bf16-aligned batch tile (<=2048 rows) that fits the VMEM budget."""
    t = min(_round_up(max(n, 16), 16), _MAX_TILE_ROWS)
    while t > 16 and _vmem_bytes(t, c, k_pad) > _VMEM_BUDGET:
        t = _round_up(t // 2, 16)
    return t


def attention_kernel(
    x_ref,        # (TN, C)  bf16   input tile
    w_attn_ref,   # (C, C)   bf16   attn Linear weight, pre-transposed (in, out)
    a_attn_ref,   # (1,)     SMEM   attn PReLU slope
    w1_ref,       # (C, C)   bf16   Linear1 weight with LN-affine + BN folded, (in, out)
    b1_ref,       # (1, C)   f32    folded Linear1 bias
    a_fc_ref,     # (1,)     SMEM   fc PReLU slope
    w2_ref,       # (C, Kp)  bf16   Linear2 weight, pre-transposed + lane-padded
    b2_ref,       # (1, Kp)  f32    Linear2 bias, lane-padded
    out_ref,      # (TN, Kp) bf16   output tile (lane-dense)
):
    x_bf = x_ref[...]                      # bf16 operand for the MXU
    x = x_bf.astype(jnp.float32)           # f32 copy for elementwise math

    # ---- attention branch: Linear(no bias) -> PReLU -> (Dropout: eval id) -> Tanh
    h = jnp.dot(x_bf, w_attn_ref[...], preferred_element_type=jnp.float32)
    a1 = a_attn_ref[0]
    h = jnp.where(h >= 0.0, h, a1 * h)
    attn = jnp.tanh(h)

    # ---- gating
    mx = x * attn

    # ---- fc head: LayerNorm normalization (affine folded into w1/b1), f32 math
    mean = jnp.mean(mx, axis=-1, keepdims=True)
    cen = mx - mean
    var = jnp.mean(cen * cen, axis=-1, keepdims=True)
    y = cen * jax.lax.rsqrt(var + LN_EPS)

    # Linear1 with LN-affine + eval-mode BatchNorm folded in (bf16 MXU, f32 acc)
    y = jnp.dot(y.astype(jnp.bfloat16), w1_ref[...],
                preferred_element_type=jnp.float32) + b1_ref[...]

    # PReLU  (Dropout: eval identity)
    a2 = a_fc_ref[0]
    y = jnp.where(y >= 0.0, y, a2 * y)

    # Linear2 -> logits (lane-padded, bf16 writeback)
    out = jnp.dot(y.astype(jnp.bfloat16), w2_ref[...],
                  preferred_element_type=jnp.float32) + b2_ref[...]
    out_ref[...] = out.astype(out_ref.dtype)


@jax.jit
def attention_forward(x, params):
    N, C = x.shape
    K = params["w2"].shape[0]

    # PReLU in the module uses a single shared slope (num_parameters=1).
    assert params["a_attn"].shape == (1,), "expected scalar PReLU slope (num_parameters=1)"
    assert params["a_fc"].shape == (1,), "expected scalar PReLU slope (num_parameters=1)"

    k_pad = _round_up(max(K, 128), 128)          # lane-dense output
    n_tile = _pick_n_tile(N, C, k_pad)           # single big tile when it fits
    n_pad = _round_up(N, n_tile)

    f32, bf16 = jnp.float32, jnp.bfloat16

    x_p = x.astype(bf16)
    if n_pad != N:
        x_p = jnp.pad(x_p, ((0, n_pad - N), (0, 0)))

    # ---- wrapper-side layout plumbing / constant folding (eval mode only) ----
    # attn weight: pre-transpose to (in, out), bf16
    w_attn_t = params["w_attn"].astype(f32).T.astype(bf16)

    # Fold LayerNorm affine and eval-mode BatchNorm into Linear1 (fold in f32):
    #   BN(z) = s * (z - rm) + bn_b,  s = bn_g / sqrt(rv + eps)
    #   z     = (norm * ln_g + ln_b) @ w1.T + b1
    # => result = norm @ (s[:,None] * w1 * ln_g[None,:]).T
    #             + s * (ln_b @ w1.T + b1 - rm) + bn_b
    w1 = params["w1"].astype(f32)
    b1 = params["b1"].astype(f32)
    ln_g = params["ln_g"].astype(f32)
    ln_b = params["ln_b"].astype(f32)
    s = params["bn_g"].astype(f32) * jax.lax.rsqrt(params["bn_rv"].astype(f32) + BN_EPS)
    w1_fold_t = ((s[:, None] * w1) * ln_g[None, :]).T.astype(bf16)        # (C_in, C_out)
    b1_fold = s * (ln_b @ w1.T + b1 - params["bn_rm"].astype(f32)) + params["bn_b"].astype(f32)

    # Linear2: pre-transpose, pad the class dim to a lane-dense width, bf16.
    w2 = params["w2"].astype(f32)
    b2 = params["b2"].astype(f32)
    w2_pad_t = jnp.zeros((C, k_pad), f32).at[:, :K].set(w2.T).astype(bf16)  # (C, Kp)
    b2_pad = jnp.zeros((k_pad,), f32).at[:K].set(b2)

    row_map = lambda i: (i, 0)    # tile over batch rows
    full_map = lambda i: (0, 0)   # grid-invariant block
    smem_spec = pl.BlockSpec(memory_space=pltpu.MemorySpace.SMEM)
    single = pl.Buffered(1)       # weights never change across grid steps

    grid_spec = pltpu.PrefetchScalarGridSpec(
        num_scalar_prefetch=0,
        grid=(n_pad // n_tile,),
        in_specs=[
            pl.BlockSpec((n_tile, C), row_map),                            # x (bf16)
            pl.BlockSpec((C, C), full_map, pipeline_mode=single),          # w_attn
            smem_spec,                                                     # a_attn
            pl.BlockSpec((C, C), full_map, pipeline_mode=single),          # w1 (folded)
            pl.BlockSpec((1, C), full_map, pipeline_mode=single),          # b1 (folded)
            smem_spec,                                                     # a_fc
            pl.BlockSpec((C, k_pad), full_map, pipeline_mode=single),      # w2 (padded)
            pl.BlockSpec((1, k_pad), full_map, pipeline_mode=single),      # b2 (padded)
        ],
        out_specs=pl.BlockSpec((n_tile, k_pad), row_map),
    )

    # Scoped VMEM limit: padded-size estimate + 25% headroom, capped below v7x's
    # 64 MiB physical VMEM.
    vmem_est = _vmem_bytes(n_tile, C, k_pad)
    vmem_limit = int(min(_VMEM_LIMIT_CAP, max(int(vmem_est * 1.25), 4 * 1024 * 1024)))

    out_pad = pl.pallas_call(
        attention_kernel,
        out_shape=jax.ShapeDtypeStruct((n_pad, k_pad), jnp.bfloat16),
        grid_spec=grid_spec,
        compiler_params=pltpu.CompilerParams(
            dimension_semantics=("parallel",),
            vmem_limit_bytes=vmem_limit,
        ),
    )(
        x_p,
        w_attn_t,
        params["a_attn"].astype(f32),
        w1_fold_t,
        b1_fold.reshape(1, C),
        params["a_fc"].astype(f32),
        w2_pad_t,
        b2_pad.reshape(1, k_pad),
    )

    return out_pad[:N, :K].astype(f32)


def reference_forward(x, p):
    """Pure-JAX reference (eval-mode semantics), for a numerical sanity check."""
    a1 = p["a_attn"][0]
    h = x @ p["w_attn"].T
    h = jnp.where(h >= 0, h, a1 * h)
    attn = jnp.tanh(h)
    mx = x * attn
    mean = mx.mean(-1, keepdims=True)
    var = ((mx - mean) ** 2).mean(-1, keepdims=True)
    y = (mx - mean) / jnp.sqrt(var + LN_EPS) * p["ln_g"] + p["ln_b"]
    y = y @ p["w1"].T + p["b1"]
    y = (y - p["bn_rm"]) / jnp.sqrt(p["bn_rv"] + BN_EPS) * p["bn_g"] + p["bn_b"]
    a2 = p["a_fc"][0]
    y = jnp.where(y >= 0, y, a2 * y)
    return y @ p["w2"].T + p["b2"]


def init_params(key, channels, n_classes):
    ks = jax.random.split(key, 8)
    s = 1.0 / jnp.sqrt(channels)
    return {
        "w_attn": jax.random.uniform(ks[0], (channels, channels), jnp.float32, -s, s),
        "a_attn": jnp.array([0.05], jnp.float32),
        "ln_g": jnp.ones((channels,), jnp.float32),
        "ln_b": jnp.zeros((channels,), jnp.float32),
        "w1": jax.random.uniform(ks[1], (channels, channels), jnp.float32, -s, s),
        "b1": jax.random.uniform(ks[2], (channels,), jnp.float32, -s, s),
        "bn_g": jnp.ones((channels,), jnp.float32),
        "bn_b": jnp.zeros((channels,), jnp.float32),
        "bn_rm": 0.1 * jax.random.normal(ks[3], (channels,), jnp.float32),
        "bn_rv": 1.0 + 0.1 * jax.random.uniform(ks[4], (channels,), jnp.float32),
        "a_fc": jnp.array([0.05], jnp.float32),
        "w2": jax.random.uniform(ks[5], (n_classes, channels), jnp.float32, -s, s),
        "b2": jax.random.uniform(ks[6], (n_classes,), jnp.float32, -s, s),
    }


if __name__ == "__main__":
    key = jax.random.PRNGKey(0)
    k_x, k_p = jax.random.split(key)

    N, C, K = 16, 32, 4          # batch, channels, n_classes
    x = jax.random.normal(k_x, (N, C), jnp.float32)
    params = init_params(k_p, C, K)

    out = attention_forward(x, params)
    out = jax.block_until_ready(out)

    ref = reference_forward(x, params)
    assert out.shape == (N, K)
    # bf16 MXU operands + bf16 writeback -> loosen tolerance vs the f32 reference.
    assert jnp.allclose(out, ref, atol=5e-2, rtol=5e-2), "mismatch vs JAX reference"

    print("KERNEL_OK")
</pallas_src>

<mosaic_0001>
module attributes {stable_mosaic.version = 11 : i64} {
  func.func @attention_kernel(%arg0: i32, %arg1: memref<16x32xbf16, #tpu.memory_space<vmem>>, %arg2: memref<32x32xbf16, #tpu.memory_space<vmem>>, %arg3: memref<1xf32, #tpu.memory_space<smem>>, %arg4: memref<32x32xbf16, #tpu.memory_space<vmem>>, %arg5: memref<1x32xf32, #tpu.memory_space<vmem>>, %arg6: memref<1xf32, #tpu.memory_space<smem>>, %arg7: memref<32x128xbf16, #tpu.memory_space<vmem>>, %arg8: memref<1x128xf32, #tpu.memory_space<vmem>>, %arg9: memref<16x128xbf16, #tpu.memory_space<vmem>>) attributes {dimension_semantics = [#tpu.dimension_semantics<parallel>], iteration_bounds = array<i64: 1>, scalar_prefetch = 0 : i64, scratch_operands = 0 : i64, tpu.core_type = #tpu.core_type<tc>, window_params = [{transform_indices = @transform_0, window_bounds = array<i64: 16, 32>}, {pipeline_mode = #tpu.pipeline_mode<synchronous>, transform_indices = @transform_1, window_bounds = array<i64: 32, 32>}, {transform_indices = @transform_2, window_bounds = array<i64: 1>}, {pipeline_mode = #tpu.pipeline_mode<synchronous>, transform_indices = @transform_3, window_bounds = array<i64: 32, 32>}, {pipeline_mode = #tpu.pipeline_mode<synchronous>, transform_indices = @transform_4, window_bounds = array<i64: 1, 32>}, {transform_indices = @transform_5, window_bounds = array<i64: 1>}, {pipeline_mode = #tpu.pipeline_mode<synchronous>, transform_indices = @transform_6, window_bounds = array<i64: 32, 128>}, {pipeline_mode = #tpu.pipeline_mode<synchronous>, transform_indices = @transform_7, window_bounds = array<i64: 1, 128>}, {transform_indices = @transform_8, window_bounds = array<i64: 16, 128>}]} {
    %c0 = arith.constant 0 : index
    %c0_0 = arith.constant 0 : index
    %0 = vector.load %arg1[%c0, %c0_0] : memref<16x32xbf16, #tpu.memory_space<vmem>>, vector<16x32xbf16>
    %1 = arith.extf %0 : vector<16x32xbf16> to vector<16x32xf32>
    %c0_1 = arith.constant 0 : index
    %c0_2 = arith.constant 0 : index
    %2 = vector.load %arg2[%c0_1, %c0_2] : memref<32x32xbf16, #tpu.memory_space<vmem>>, vector<32x32xbf16>
    %cst = arith.constant dense<0.000000e+00> : vector<16x32xf32>
    %3 = tpu.matmul %0, %2, %cst {dimension_numbers = #tpu.dot_dimension_numbers<[1], [0], [0], [1], [0, 0, 1, 1], [], []>} : vector<16x32xbf16>, vector<32x32xbf16>, vector<16x32xf32> -> vector<16x32xf32>
    %c0_3 = arith.constant 0 : index
    %4 = memref.load %arg3[%c0_3] : memref<1xf32, #tpu.memory_space<smem>>
    %cst_4 = arith.constant 0.000000e+00 : f32
    %5 = vector.broadcast %cst_4 : f32 to vector<16x32xf32>
    %6 = arith.cmpf oge, %3, %5 : vector<16x32xf32>
    %7 = vector.broadcast %4 : f32 to vector<16x32xf32>
    %8 = arith.mulf %7, %3 : vector<16x32xf32>
    %9 = arith.select %6, %3, %8 : vector<16x32xi1>, vector<16x32xf32>
    %10 = math.tanh %9 : vector<16x32xf32>
    %11 = arith.mulf %1, %10 : vector<16x32xf32>
    %cst_5 = arith.constant dense<0.000000e+00> : vector<16xf32>
    %12 = vector.multi_reduction <add>, %11, %cst_5 [1] : vector<16x32xf32> to vector<16xf32>
    %13 = vector.shape_cast %12 : vector<16xf32> to vector<16x1xf32>
    %cst_6 = arith.constant 3.200000e+01 : f32
    %14 = vector.broadcast %cst_6 : f32 to vector<16x1xf32>
    %15 = arith.divf %13, %14 : vector<16x1xf32>
    %16 = vector.broadcast %15 : vector<16x1xf32> to vector<16x32xf32>
    %17 = arith.subf %11, %16 : vector<16x32xf32>
    %18 = arith.mulf %17, %17 : vector<16x32xf32>
    %cst_7 = arith.constant dense<0.000000e+00> : vector<16xf32>
    %19 = vector.multi_reduction <add>, %18, %cst_7 [1] : vector<16x32xf32> to vector<16xf32>
    %20 = vector.shape_cast %19 : vector<16xf32> to vector<16x1xf32>
    %cst_8 = arith.constant 3.200000e+01 : f32
    %21 = vector.broadcast %cst_8 : f32 to vector<16x1xf32>
    %22 = arith.divf %20, %21 : vector<16x1xf32>
    %cst_9 = arith.constant 9.99999974E-6 : f32
    %23 = vector.broadcast %cst_9 : f32 to vector<16x1xf32>
    %24 = arith.addf %22, %23 : vector<16x1xf32>
    %25 = math.rsqrt %24 : vector<16x1xf32>
    %26 = vector.broadcast %25 : vector<16x1xf32> to vector<16x32xf32>
    %27 = arith.mulf %17, %26 : vector<16x32xf32>
    %28 = arith.truncf %27 : vector<16x32xf32> to vector<16x32xbf16>
    %c0_10 = arith.constant 0 : index
    %c0_11 = arith.constant 0 : index
    %29 = vector.load %arg4[%c0_10, %c0_11] : memref<32x32xbf16, #tpu.memory_space<vmem>>, vector<32x32xbf16>
    %cst_12 = arith.constant dense<0.000000e+00> : vector<16x32xf32>
    %30 = tpu.matmul %28, %29, %cst_12 {dimension_numbers = #tpu.dot_dimension_numbers<[1], [0], [0], [1], [0, 0, 1, 1], [], []>} : vector<16x32xbf16>, vector<32x32xbf16>, vector<16x32xf32> -> vector<16x32xf32>
    %c0_13 = arith.constant 0 : index
    %c0_14 = arith.constant 0 : index
    %31 = vector.load %arg5[%c0_13, %c0_14] : memref<1x32xf32, #tpu.memory_space<vmem>>, vector<1x32xf32>
    %32 = vector.broadcast %31 : vector<1x32xf32> to vector<16x32xf32>
    %33 = arith.addf %30, %32 : vector<16x32xf32>
    %c0_15 = arith.constant 0 : index
    %34 = memref.load %arg6[%c0_15] : memref<1xf32, #tpu.memory_space<smem>>
    %cst_16 = arith.constant 0.000000e+00 : f32
    %35 = vector.broadcast %cst_16 : f32 to vector<16x32xf32>
    %36 = arith.cmpf oge, %33, %35 : vector<16x32xf32>
    %37 = vector.broadcast %34 : f32 to vector<16x32xf32>
    %38 = arith.mulf %37, %33 : vector<16x32xf32>
    %39 = arith.select %36, %33, %38 : vector<16x32xi1>, vector<16x32xf32>
    %40 = arith.truncf %39 : vector<16x32xf32> to vector<16x32xbf16>
    %c0_17 = arith.constant 0 : index
    %c0_18 = arith.constant 0 : index
    %41 = vector.load %arg7[%c0_17, %c0_18] : memref<32x128xbf16, #tpu.memory_space<vmem>>, vector<32x128xbf16>
    %cst_19 = arith.constant dense<0.000000e+00> : vector<16x128xf32>
    %42 = tpu.matmul %40, %41, %cst_19 {dimension_numbers = #tpu.dot_dimension_numbers<[1], [0], [0], [1], [0, 0, 1, 1], [], []>} : vector<16x32xbf16>, vector<32x128xbf16>, vector<16x128xf32> -> vector<16x128xf32>
    %c0_20 = arith.constant 0 : index
    %c0_21 = arith.constant 0 : index
    %43 = vector.load %arg8[%c0_20, %c0_21] : memref<1x128xf32, #tpu.memory_space<vmem>>, vector<1x128xf32>
    %44 = vector.broadcast %43 : vector<1x128xf32> to vector<16x128xf32>
    %45 = arith.addf %42, %44 : vector<16x128xf32>
    %46 = arith.truncf %45 : vector<16x128xf32> to vector<16x128xbf16>
    %c0_22 = arith.constant 0 : index
    %c0_23 = arith.constant 0 : index
    %47 = vector.load %arg9[%c0_22, %c0_23] : memref<16x128xbf16, #tpu.memory_space<vmem>>, vector<16x128xbf16>
    tpu.vector_store %arg9[%c0_22, %c0_23], %46 {strides = array<i32>} : memref<16x128xbf16, #tpu.memory_space<vmem>>, vector<16x128xbf16>,
    return
  }
  func.func @transform_0(%arg0: i32) -> (i32, i32) {
    %c0_i32 = arith.constant 0 : i32
    %c0_i32_0 = arith.constant 0 : i32
    return %arg0, %c0_i32 : i32, i32
  }
  func.func @transform_1(%arg0: i32) -> (i32, i32) {
    %c0_i32 = arith.constant 0 : i32
    %c0_i32_0 = arith.constant 0 : i32
    %c0_i32_1 = arith.constant 0 : i32
    return %c0_i32, %c0_i32_0 : i32, i32
  }
  func.func @transform_2(%arg0: i32) -> i32 {
    %c0_i32 = arith.constant 0 : i32
    %c0_i32_0 = arith.constant 0 : i32
    return %c0_i32 : i32
  }
  func.func @transform_3(%arg0: i32) -> (i32, i32) {
    %c0_i32 = arith.constant 0 : i32
    %c0_i32_0 = arith.constant 0 : i32
    %c0_i32_1 = arith.constant 0 : i32
    return %c0_i32, %c0_i32_0 : i32, i32
  }
  func.func @transform_4(%arg0: i32) -> (i32, i32) {
    %c0_i32 = arith.constant 0 : i32
    %c0_i32_0 = arith.constant 0 : i32
    %c0_i32_1 = arith.constant 0 : i32
    return %c0_i32, %c0_i32_0 : i32, i32
  }
  func.func @transform_5(%arg0: i32) -> i32 {
    %c0_i32 = arith.constant 0 : i32
    %c0_i32_0 = arith.constant 0 : i32
    return %c0_i32 : i32
  }
  func.func @transform_6(%arg0: i32) -> (i32, i32) {
    %c0_i32 = arith.constant 0 : i32
    %c0_i32_0 = arith.constant 0 : i32
    %c0_i32_1 = arith.constant 0 : i32
    return %c0_i32, %c0_i32_0 : i32, i32
  }
  func.func @transform_7(%arg0: i32) -> (i32, i32) {
    %c0_i32 = arith.constant 0 : i32
    %c0_i32_0 = arith.constant 0 : i32
    %c0_i32_1 = arith.constant 0 : i32
    return %c0_i32, %c0_i32_0 : i32, i32
  }
  func.func @transform_8(%arg0: i32) -> (i32, i32) {
    %c0_i32 = arith.constant 0 : i32
    %c0_i32_0 = arith.constant 0 : i32
    return %arg0, %c0_i32 : i32, i32
  }
}

</mosaic_0001>

<llo_original>
// kernel: attention_forward.1
$region0: #{attention_forward.1}
  #allocation0 [shape = 'u32[]', space=smem, size = 0x4, offset = 0x4, fixed_abs, tag = 'smem constant byte address 0x4 - core index']
  #allocation1 [shape = 'u32[144,128]{1,0:T(1,128)}', space=vmem, size = 0x12000, scoped, tag = 'internal scratch']
  #allocation2 [shape = 'f32[1]{0:T(128)S(6)}', space=smem, size = 0x200, scoped, tag = 'scoped memory for attention_forward.1']
  #allocation3 [shape = 'f32[1]{0:T(128)S(6)}', space=smem, size = 0x200, scoped, tag = 'scoped memory for attention_forward.1']
  %s0 = inlined_call_operand.vmem [shape: bf16[16,32], index: 0, kind: input, shape index: {}]
  %s1 = inlined_call_operand.vmem [shape: bf16[32,32], index: 1, kind: input, shape index: {}]
  %s2 = inlined_call_operand.<no memory space> [shape: f32[1], index: 2, kind: input, shape index: {}]
  %s3 = inlined_call_operand.vmem [shape: bf16[32,32], index: 3, kind: input, shape index: {}]
  %s4 = inlined_call_operand.vmem [shape: f32[1,32], index: 4, kind: input, shape index: {}]
  %s5 = inlined_call_operand.<no memory space> [shape: f32[1], index: 5, kind: input, shape index: {}]
  %s6 = inlined_call_operand.vmem [shape: bf16[32,128], index: 6, kind: input, shape index: {}]
  %s7 = inlined_call_operand.vmem [shape: f32[1,128], index: 7, kind: input, shape index: {}]
  %s8 = inlined_call_operand.vmem [shape: bf16[16,128], index: 8, kind: output, shape index: {}]
  %s9 = sld [smem:[#allocation0]]
  $region42: #{attention_forward.1} parent=0
    _
  %s11 = ssub.s32 1, %s9
  %s12 = scalar_select 0, %s11, %s9
  %13 = sst [smem:[#allocation2]] %s2
  %14 = sst [smem:[#allocation3]] %s5
  // Predicated region
  $region2: #{attention_forward.1} parent=0 // pred_check
    _
  $region3: #{attention_forward.1} parent=0 // pred_check_branch
    %16 = sbr.rel (0) target = $region5
  $region4: #{attention_forward.1} parent=0 // pred_region
    _
  $region5: #{attention_forward.1} parent=0 // pred_fallthru
    _
  // Predicated region
  $region6: #{attention_forward.1} parent=0 // pred_check
    _
  $region7: #{attention_forward.1} parent=0 // pred_check_branch
    %18 = sbr.rel (0) target = $region9
  $region8: #{attention_forward.1} parent=0 // pred_region
    _
  $region9: #{attention_forward.1} parent=0 // pred_fallthru
    _
  // Predicated region
  $region10: #{attention_forward.1} parent=0 // pred_check
    _
  $region11: #{attention_forward.1} parent=0 // pred_check_branch
    %20 = sbr.rel (0) target = $region13
  $region12: #{attention_forward.1} parent=0 // pred_region
    _
  $region13: #{attention_forward.1} parent=0 // pred_fallthru
    _
  // Predicated region
  $region14: #{attention_forward.1} parent=0 // pred_check
    _
  $region15: #{attention_forward.1} parent=0 // pred_check_branch
    %22 = sbr.rel (0) target = $region17
  $region16: #{attention_forward.1} parent=0 // pred_region
    _
  $region17: #{attention_forward.1} parent=0 // pred_fallthru
    _
  // Predicated region
  $region18: #{attention_forward.1} parent=0 // pred_check
    _
  $region19: #{attention_forward.1} parent=0 // pred_check_branch
    %24 = sbr.rel (0) target = $region21
  $region20: #{attention_forward.1} parent=0 // pred_region
    _
  $region21: #{attention_forward.1} parent=0 // pred_fallthru
    _
  // Predicated region
  $region22: #{attention_forward.1} parent=0 // pred_check
    _
  $region23: #{attention_forward.1} parent=0 // pred_check_branch
    %26 = sbr.rel (0) target = $region25
  $region24: #{attention_forward.1} parent=0 // pred_region
    _
  $region25: #{attention_forward.1} parent=0 // pred_fallthru
    _
  // Predicated region
  $region26: #{attention_forward.1} parent=0 // pred_check
    _
  $region27: #{attention_forward.1} parent=0 // pred_check_branch
    %28 = sbr.rel (0) target = $region29
  $region28: #{attention_forward.1} parent=0 // pred_region
    _
  $region29: #{attention_forward.1} parent=0 // pred_fallthru
    _
  // Predicated region
  $region30: #{attention_forward.1} parent=0 // pred_check
    _
  $region31: #{attention_forward.1} parent=0 // pred_check_branch
    %30 = sbr.rel (0) target = $region33
  $region32: #{attention_forward.1} parent=0 // pred_region
    _
  $region33: #{attention_forward.1} parent=0 // pred_fallthru
    _
  %v32 = vld [vmem:[%s0] sm:$0xf]
  %v33 = vld [vmem:[%s0 + $0x4] sm:$0xf]
  %v34 = vunpack.c.l.bf16 %v32
  %v35 = vunpack.c.l.bf16 %v33
  %v36 = vld [vmem:[%s1] sm:$0xf]
  %v37 = vld [vmem:[%s1 + $0x4] sm:$0xf]
  %v38 = vld [vmem:[%s1 + $0x8] sm:$0xf]
  %v39 = vld [vmem:[%s1 + $0xc] sm:$0xf]
  %v42 = vunpack.c.l.b16 %v32
  %v43 = vunpack.c.l.b16 %v33
  %v44 = vpack.c.b16 %v43, %v42
  %v49 = vunpack.c.l.b16 %v36
  %v50 = vunpack.c.l.b16 %v37
  %v51 = vunpack.c.l.b16 %v38
  %v52 = vunpack.c.l.b16 %v39
  %v53 = vpack.c.b16 %v50, %v49
  %v54 = vpack.c.b16 %v52, %v51
  %vm57 = vcmask 261120
  %v59 = vsel %vm57, %v44, 0
  %61 = vmatprep.subr.bf16.mxu0 0
  %62 = vmatpush1.bf16.msra.mxu0 %v53
  %63 = vmatprep.subr.bf16.mxu0 0
  %64 = vmatpush1.bf16.msra.mxu0 %v54
  %65 = vmatprep.subr.bf16.mxu0 0
  %66 = vmatpush1.bf16.msra.mxu0 0
  %67 = vmatprep.subr.bf16.mxu0 0
  %68 = vmatpush1.bf16.msra.mxu0 0
  %69 = vmatprep.subr.bf16.mxu0 0
  %70 = vmatpush1.bf16.msra.mxu0 0
  %71 = vmatprep.subr.bf16.mxu0 0
  %72 = vmatpush1.bf16.msra.mxu0 0
  %73 = vmatprep.subr.bf16.mxu0 0
  %74 = vmatpush1.bf16.msra.mxu0 0
  %75 = vmatprep.subr.bf16.mxu0 0
  %76 = vmatpush1.bf16.msra.mxu0 0
  %77 = vmatprep.subr.bf16.mxu0 0
  %78 = vmatpush1.bf16.msra.mxu0 0
  %79 = vmatprep.subr.bf16.mxu0 0
  %80 = vmatpush1.bf16.msra.mxu0 0
  %81 = vmatprep.subr.bf16.mxu0 0
  %82 = vmatpush1.bf16.msra.mxu0 0
  %83 = vmatprep.subr.bf16.mxu0 0
  %84 = vmatpush1.bf16.msra.mxu0 0
  %85 = vmatprep.subr.bf16.mxu0 0
  %86 = vmatpush1.bf16.msra.mxu0 0
  %87 = vmatprep.subr.bf16.mxu0 0
  %88 = vmatpush1.bf16.msra.mxu0 0
  %89 = vmatprep.subr.bf16.mxu0 0
  %90 = vmatpush1.bf16.msra.mxu0 0
  %91 = vmatprep.subr.bf16.mxu0 0
  %92 = vmatpush1.bf16.msra.mxu0 0
  %93 = vmatprep.mubr.bf16.mxu0 0
  %94 = vmatmul.mubr.bf16.gmra.mrb[0].mxu0 %v59
  %v95 = vpop.f32.mrb[0].mxu0
  %v96 = vadd.f32 0.0, %v95
  %v97 = vpop.f32.mrb[0].mxu0
  %v98 = vpop.f32.mrb[0].mxu0
  %v99 = vadd.f32 0.0, %v98
  %v100 = vpop.f32.mrb[0].mxu0
  %101 = vdwg.mxu0
  %s102 = sld [smem:[#allocation2]]
  %vm103 = vcmp.ge.f32.partialorder %v96, 0.0
  %vm104 = vcmp.ge.f32.partialorder %v99, 0.0
  %v105 = vstv %s102
  %v106 = vmul.f32 %v105, %v96
  %v107 = vmul.f32 %v105, %v99
  %v108 = vsel %vm103, %v96, %v106
  %v109 = vsel %vm104, %v99, %v107
  %v110 = vtanh.pop %v108
  %v111 = vtanh.pop %v109
  %v112 = vmul.f32 %v34, %v110
  %v113 = vmul.f32 %v35, %v111
  %v114 = vsel %vm57, %v112, 0.0
  %115 = vadd.xlane.f32.xlu0 %v114
  %v116 = vpop.xlane.xlu0 %115
  %v117 = vsel %vm57, %v113, 0.0
  %118 = vadd.xlane.f32.xlu0 %v117
  %v119 = vpop.xlane.xlu0 %118
  %v120 = vrcp.pop 32.0
  %v121 = vmul.f32 %v116, %v120
  %v122 = vmul.f32 %v119, %v120
  %v123 = vsub.f32 %v112, %v121
  %v124 = vsub.f32 %v113, %v122
  %v125 = vmul.f32 %v123, %v123
  %v126 = vmul.f32 %v124, %v124
  %v127 = vsel %vm57, %v125, 0.0
  %128 = vadd.xlane.f32.xlu0 %v127
  %v129 = vpop.xlane.xlu0 %128
  %v130 = vsel %vm57, %v126, 0.0
  %131 = vadd.xlane.f32.xlu0 %v130
  %v132 = vpop.xlane.xlu0 %131
  %v133 = vmul.f32 %v129, %v120
  %v134 = vmul.f32 %v132, %v120
  %v135 = vadd.f32 %v133, 1e-05
  %v136 = vadd.f32 %v134, 1e-05
  %v137 = vrsqrt.pop %v135
  %v138 = vrsqrt.pop %v136
  %v139 = vmul.f32 %v123, %v137
  %v140 = vmul.f32 %v124, %v138
  %v141 = vpack.c.bf16 %v140, %v139
  %v142 = vld [vmem:[%s3] sm:$0xf]
  %v143 = vld [vmem:[%s3 + $0x4] sm:$0xf]
  %v144 = vld [vmem:[%s3 + $0x8] sm:$0xf]
  %v145 = vld [vmem:[%s3 + $0xc] sm:$0xf]
  %v146 = vld [vmem:[%s4] sm:$0x1]
  %v148 = vlaneseq
  %v149 = vshrl.u32 %v148, 7
  %v150 = vsub.s32 0, %v149
  %v151 = vrot.slane %v146, %v150
  %v157 = vunpack.c.l.b16 %v142
  %v158 = vunpack.c.l.b16 %v143
  %v159 = vunpack.c.l.b16 %v144
  %v160 = vunpack.c.l.b16 %v145
  %v161 = vpack.c.b16 %v158, %v157
  %v162 = vpack.c.b16 %v160, %v159
  %v166 = vsel %vm57, %v141, 0
  %168 = vmatprep.subr.bf16.mxu0 0
  %169 = vmatpush1.bf16.msra.mxu0 %v161
  %170 = vmatprep.subr.bf16.mxu0 0
  %171 = vmatpush1.bf16.msra.mxu0 %v162
  %172 = vmatprep.subr.bf16.mxu0 0
  %173 = vmatpush1.bf16.msra.mxu0 0
  %174 = vmatprep.subr.bf16.mxu0 0
  %175 = vmatpush1.bf16.msra.mxu0 0
  %176 = vmatprep.subr.bf16.mxu0 0
  %177 = vmatpush1.bf16.msra.mxu0 0
  %178 = vmatprep.subr.bf16.mxu0 0
  %179 = vmatpush1.bf16.msra.mxu0 0
  %180 = vmatprep.subr.bf16.mxu0 0
  %181 = vmatpush1.bf16.msra.mxu0 0
  %182 = vmatprep.subr.bf16.mxu0 0
  %183 = vmatpush1.bf16.msra.mxu0 0
  %184 = vmatprep.subr.bf16.mxu0 0
  %185 = vmatpush1.bf16.msra.mxu0 0
  %186 = vmatprep.subr.bf16.mxu0 0
  %187 = vmatpush1.bf16.msra.mxu0 0
  %188 = vmatprep.subr.bf16.mxu0 0
  %189 = vmatpush1.bf16.msra.mxu0 0
  %190 = vmatprep.subr.bf16.mxu0 0
  %191 = vmatpush1.bf16.msra.mxu0 0
  %192 = vmatprep.subr.bf16.mxu0 0
  %193 = vmatpush1.bf16.msra.mxu0 0
  %194 = vmatprep.subr.bf16.mxu0 0
  %195 = vmatpush1.bf16.msra.mxu0 0
  %196 = vmatprep.subr.bf16.mxu0 0
  %197 = vmatpush1.bf16.msra.mxu0 0
  %198 = vmatprep.subr.bf16.mxu0 0
  %199 = vmatpush1.bf16.msra.mxu0 0
  %200 = vmatprep.mubr.bf16.mxu0 0
  %201 = vmatmul.mubr.bf16.gmra.mrb[0].mxu0 %v166
  %v202 = vpop.f32.mrb[0].mxu0
  %v203 = vadd.f32 %v151, %v202
  %v204 = vpop.f32.mrb[0].mxu0
  %v205 = vpop.f32.mrb[0].mxu0
  %v206 = vadd.f32 %v151, %v205
  %v207 = vpop.f32.mrb[0].mxu0
  %208 = vdwg.mxu0
  %s209 = sld [smem:[#allocation3]]
  %vm210 = vcmp.ge.f32.partialorder %v203, 0.0
  %vm211 = vcmp.ge.f32.partialorder %v206, 0.0
  %v212 = vstv %s209
  %v213 = vmul.f32 %v212, %v203
  %v214 = vmul.f32 %v212, %v206
  %v215 = vsel %vm210, %v203, %v213
  %v216 = vsel %vm211, %v206, %v214
  %v217 = vpack.c.bf16 %v216, %v215
  %v218 = vld [vmem:[%s6] sm:$0xf]
  %v219 = vld [vmem:[%s6 + $0x4] sm:$0xf]
  %v220 = vld [vmem:[%s6 + $0x8] sm:$0xf]
  %v221 = vld [vmem:[%s6 + $0xc] sm:$0xf]
  %v222 = vld [vmem:[%s7] sm:$0x1]
  %v224 = vlaneseq
  %v225 = vshrl.u32 %v224, 7
  %v226 = vsub.s32 0, %v225
  %v227 = vrot.slane %v222, %v226
  %v233 = vunpack.c.l.b16 %v218
  %v234 = vunpack.c.l.b16 %v219
  %v235 = vunpack.c.l.b16 %v220
  %v236 = vunpack.c.l.b16 %v221
  %v237 = vpack.c.b16 %v234, %v233
  %v238 = vpack.c.b16 %v236, %v235
  %v242 = vsel %vm57, %v217, 0
  %244 = vmatprep.subr.bf16.mxu0 0
  %245 = vmatpush1.bf16.msra.mxu0 %v237
  %246 = vmatprep.subr.bf16.mxu0 0
  %247 = vmatpush1.bf16.msra.mxu0 %v238
  %248 = vmatprep.subr.bf16.mxu0 0
  %249 = vmatpush1.bf16.msra.mxu0 0
  %250 = vmatprep.subr.bf16.mxu0 0
  %251 = vmatpush1.bf16.msra.mxu0 0
  %252 = vmatprep.subr.bf16.mxu0 0
  %253 = vmatpush1.bf16.msra.mxu0 0
  %254 = vmatprep.subr.bf16.mxu0 0
  %255 = vmatpush1.bf16.msra.mxu0 0
  %256 = vmatprep.subr.bf16.mxu0 0
  %257 = vmatpush1.bf16.msra.mxu0 0
  %258 = vmatprep.subr.bf16.mxu0 0
  %259 = vmatpush1.bf16.msra.mxu0 0
  %260 = vmatprep.subr.bf16.mxu0 0
  %261 = vmatpush1.bf16.msra.mxu0 0
  %262 = vmatprep.subr.bf16.mxu0 0
  %263 = vmatpush1.bf16.msra.mxu0 0
  %264 = vmatprep.subr.bf16.mxu0 0
  %265 = vmatpush1.bf16.msra.mxu0 0
  %266 = vmatprep.subr.bf16.mxu0 0
  %267 = vmatpush1.bf16.msra.mxu0 0
  %268 = vmatprep.subr.bf16.mxu0 0
  %269 = vmatpush1.bf16.msra.mxu0 0
  %270 = vmatprep.subr.bf16.mxu0 0
  %271 = vmatpush1.bf16.msra.mxu0 0
  %272 = vmatprep.subr.bf16.mxu0 0
  %273 = vmatpush1.bf16.msra.mxu0 0
  %274 = vmatprep.subr.bf16.mxu0 0
  %275 = vmatpush1.bf16.msra.mxu0 0
  %276 = vmatprep.mubr.bf16.mxu0 0
  %277 = vmatmul.mubr.bf16.gmra.mrb[0].mxu0 %v242
  %v278 = vpop.f32.mrb[0].mxu0
  %v279 = vadd.f32 %v227, %v278
  %v280 = vpop.f32.mrb[0].mxu0
  %v281 = vpop.f32.mrb[0].mxu0
  %v282 = vadd.f32 %v227, %v281
  %v283 = vpop.f32.mrb[0].mxu0
  %284 = vdwg.mxu0
  %v285 = vpack.c.bf16 %v282, %v279
  %v287 = vunpack.c.l.b16 %v285
  %v288 = vunpack.c.h.b16 %v285
  %v289 = vpack.c.b16 %v287, %v287
  %v290 = vpack.c.b16 %v288, %v288
  %293 = vst [vmem:[%s8] sm:$0xf] %v289
  %294 = vst [vmem:[%s8 + $0x4] sm:$0xf] %v290
  // Predicated region
  $region34: #{attention_forward.1} parent=0 // pred_check
    _
  $region35: #{attention_forward.1} parent=0 // pred_check_branch
    %296 = sbr.rel (0) target = $region37
  $region36: #{attention_forward.1} parent=0 // pred_region
    _
  $region37: #{attention_forward.1} parent=0 // pred_fallthru
    _
  // Predicated region
  $region38: #{attention_forward.1} parent=0 // pred_check
    _
  $region39: #{attention_forward.1} parent=0 // pred_check_branch
    %298 = sbr.rel (0) target = $region41
  $region40: #{attention_forward.1} parent=0 // pred_region
    _
  $region41: #{attention_forward.1} parent=0 // pred_fallthru
    _

</llo_original>
